<compile_context>
chip_gen: v7x
topology: tpu7x:2x2x1
jax: 0.10.0
libtpu: 0.0.40
codegen_flags: <defaults>
</compile_context>

<pallas_src>
import functools

import jax
import jax.numpy as jnp
from jax import lax
from jax.experimental import pallas as pl
from jax.experimental.pallas import tpu as pltpu


_HALO = 128          # halo columns appended after each time tile (>= ceil(K/stride)-1)
_CHUNK = 512         # in-kernel lane chunk: bounds live vregs to ~25
_MAX_TILE_T = 16384  # output-time tile (lanes) per grid step; ~2.6 MiB VMEM total


def _round_up(n, m):
    return ((n + m - 1) // m) * m


def _conv_tile_kernel(xm_ref, xh_ref, w_ref, b_ref, o_ref, tail_ref, *,
                      stride, ksize, cout, tile_t, chunk, halo):
    """One (time-tile, row) grid step of the strided 1-D conv.

    xm_ref:   (1, stride, tile_t)    polyphase signal tile, time on lanes
    xh_ref:   (1, stride, halo)      the `halo` phase-columns following the tile
    w_ref:    (Cout, K)              conv weights (VMEM-resident across the grid)
    b_ref:    (Cout, 1)              bias (VMEM-resident)
    o_ref:    (1, Cout, tile_t)      output tile, T on the lane axis (final layout)
    tail_ref: (stride, chunk+halo)   scratch: last chunk stitched with the halo
    """
    nq = -(-ksize // stride)                 # taps per phase = ceil(K/stride)
    slab_w = chunk + halo
    n_chunks = tile_t // chunk

    # Stitch the last chunk + halo once so every chunk sees a uniform window.
    tail_ref[:, :chunk] = xm_ref[0, :, tile_t - chunk:]
    tail_ref[:, chunk:] = xh_ref[0]

    def mac_chunk(off, load_slab):
        # Bias-initialised accumulator -> the final store is a pure copy.
        acc = jnp.broadcast_to(b_ref[...], (cout, chunk))
        for p in range(stride):              # static unroll over phases
            if p >= ksize:
                continue                     # phase contributes no taps
            slab = jnp.broadcast_to(load_slab(p), (cout, slab_w))
            for q in range(nq):              # static unroll over taps
                k = q * stride + p
                if k >= ksize:
                    break
                # slab[:, q + l] == x_p[t0 + off + l + q]  (VPU broadcast MAC)
                acc = acc + w_ref[:, k:k + 1] * slab[:, q:q + chunk]
        o_ref[0, :, pl.ds(off, chunk)] = acc

    if n_chunks > 1:
        @pl.loop(0, n_chunks - 1)
        def _(c):
            off = pl.multiple_of(c * chunk, chunk)
            mac_chunk(off, lambda p: xm_ref[0, pl.ds(p, 1), pl.ds(off, slab_w)])

    # Last chunk reads the stitched (tile tail + halo) scratch.
    mac_chunk((n_chunks - 1) * chunk, lambda p: tail_ref[pl.ds(p, 1), :])


def encoder_mix_forward(x, weight, bias, *, stride, padding, max_tile_t=_MAX_TILE_T):
    """Forward pass of Encoder_mix.

    x:      (B, L, num_spks) float32
    weight: (Cout, 1, K)     effective (weight-normalized) conv weight
    bias:   (Cout,)
    returns (num_spks, B, Cout, T_out) float32  -- matches torch.stack([...], dim=0)
    """
    B, L, S = x.shape
    Cout, Cin, K = weight.shape
    assert Cin == 1, "Encoder_mix's forward implies in_channels == 1"
    s = int(stride)
    P = int(padding)
    Lp = L + 2 * P
    T_out = (Lp - K) // s + 1
    assert T_out > 0
    nq = -(-K // s)
    assert nq - 1 <= _HALO, "kernel_size too large for the fixed halo width"

    # --- balanced, chunk-aligned tiling of the output time (lane) axis ---
    n_t = pl.cdiv(T_out, max_tile_t)
    tile_t = _round_up(pl.cdiv(T_out, n_t), _CHUNK)
    n_t = pl.cdiv(T_out, tile_t)            # recompute: guarantees no fully-OOB tile
    T_tot = n_t * tile_t + _HALO            # phase-time columns incl. trailing halo

    # --- glue: one zero-pad + one transpose (no gather, no halo duplication) ---
    right = s * T_tot - P - L
    assert right >= 0
    xpad = jnp.pad(x.astype(jnp.float32), ((0, 0), (P, right), (0, 0)))   # (B, s*T_tot, S)
    # xph[spk*B + b, p, t] = xpad[b, t*s + p, spk]
    xph = (xpad.reshape(B, T_tot, s, S)
           .transpose(3, 0, 2, 1)
           .reshape(S * B, s, T_tot))

    w2 = weight.reshape(Cout, K).astype(jnp.float32)
    b2 = bias.reshape(Cout, 1).astype(jnp.float32)

    kernel = functools.partial(_conv_tile_kernel, stride=s, ksize=K, cout=Cout,
                               tile_t=tile_t, chunk=_CHUNK, halo=_HALO)

    out = pl.pallas_call(
        kernel,
        out_shape=jax.ShapeDtypeStruct((S * B, Cout, T_out), jnp.float32),
        grid=(n_t, S * B),                  # large time-tile axis leads (megacore)
        in_specs=[
            pl.BlockSpec((1, s, tile_t), lambda t, r: (r, 0, t)),
            pl.BlockSpec((1, s, _HALO),
                         lambda t, r: (r, 0, (t + 1) * (tile_t // _HALO))),
            pl.BlockSpec((Cout, K), lambda t, r: (0, 0)),    # resident weights
            pl.BlockSpec((Cout, 1), lambda t, r: (0, 0)),    # resident bias
        ],
        out_specs=pl.BlockSpec((1, Cout, tile_t), lambda t, r: (r, 0, t)),
        scratch_shapes=[pltpu.VMEM((s, _CHUNK + _HALO), jnp.float32)],
        compiler_params=pltpu.CompilerParams(
            dimension_semantics=("parallel", "parallel"),
            vmem_limit_bytes=16 * 1024 * 1024,
        ),
    )(xph, xph, w2, b2)                     # same array feeds main + halo specs

    return out.reshape(S, B, Cout, T_out)


def make_params(key, in_channels, out_channels, kernel_size):
    """Deterministic synthetic params mimicking weight_norm(Conv1d) + kaiming init."""
    kv, kg, kb = jax.random.split(key, 3)
    fan_in = in_channels * kernel_size
    std = (2.0 / fan_in) ** 0.5
    v = jax.random.normal(kv, (out_channels, in_channels, kernel_size), jnp.float32) * std
    g = jax.random.normal(kg, (out_channels, 1, 1), jnp.float32) * 0.1 + 1.0
    v_norm = jnp.sqrt(jnp.sum(v * v, axis=(1, 2), keepdims=True))
    weight = g * v / v_norm  # effective weight-normalized conv weight
    bound = 1.0 / (fan_in ** 0.5)
    bias = jax.random.uniform(kb, (out_channels,), jnp.float32, minval=-bound, maxval=bound)
    return weight, bias


def reference_forward(x, weight, bias, *, stride, padding):
    """Pure-JAX reference matching the PyTorch module semantics."""
    B, L, num_spks = x.shape
    outs = []
    for sp in range(num_spks):
        xs = x[:, :, sp][:, None, :]  # (B, 1, L) -- NCL
        y = lax.conv_general_dilated(
            xs, weight,
            window_strides=(stride,),
            padding=[(padding, padding)],
            dimension_numbers=("NCH", "OIH", "NCH"),
        )
        outs.append(y + bias[None, :, None])
    return jnp.stack(outs, axis=0)  # (num_spks, B, Cout, T_out)


if __name__ == "__main__":
    in_channels, out_channels, kernel_size, stride, padding = 1, 8, 4, 2, 2
    key = jax.random.PRNGKey(0)
    kx2, kp, kx3, kxl = jax.random.split(key, 4)
    weight, bias = make_params(kp, in_channels, out_channels, kernel_size)

    # 1) num_spks == 2 branch, tiny signal (single ragged output tile, single chunk).
    x2 = jax.random.normal(kx2, (2, 16, 2), jnp.float32)
    y2 = jax.block_until_ready(
        encoder_mix_forward(x2, weight, bias, stride=stride, padding=padding))
    y2_ref = reference_forward(x2, weight, bias, stride=stride, padding=padding)
    assert y2.shape == y2_ref.shape, (y2.shape, y2_ref.shape)
    assert jnp.allclose(y2, y2_ref, atol=1e-5, rtol=1e-5), "mismatch (num_spks=2)"

    # 2) num_spks == 3 branch.
    x3 = jax.random.normal(kx3, (2, 16, 3), jnp.float32)
    y3 = jax.block_until_ready(
        encoder_mix_forward(x3, weight, bias, stride=stride, padding=padding))
    y3_ref = reference_forward(x3, weight, bias, stride=stride, padding=padding)
    assert y3.shape == y3_ref.shape, (y3.shape, y3_ref.shape)
    assert jnp.allclose(y3, y3_ref, atol=1e-5, rtol=1e-5), "mismatch (num_spks=3)"

    # 3) longer signal: exercises the in-kernel chunk loop (n_chunks > 1), the
    #    stitched tail, and the ragged last output tile with the default tile size.
    xl = jax.random.normal(kxl, (2, 2600, 2), jnp.float32)
    yl = jax.block_until_ready(
        encoder_mix_forward(xl, weight, bias, stride=stride, padding=padding))
    yl_ref = reference_forward(xl, weight, bias, stride=stride, padding=padding)
    assert yl.shape == yl_ref.shape, (yl.shape, yl_ref.shape)
    assert jnp.allclose(yl, yl_ref, atol=1e-5, rtol=1e-5), "mismatch (long, default tile)"

    # 4) multi grid-tile path: several time tiles, cross-tile halo blocks, ragged tail.
    ym = jax.block_until_ready(
        encoder_mix_forward(xl, weight, bias, stride=stride, padding=padding,
                            max_tile_t=512))
    assert ym.shape == yl_ref.shape, (ym.shape, yl_ref.shape)
    assert jnp.allclose(ym, yl_ref, atol=1e-5, rtol=1e-5), "mismatch (multi grid tile)"

    print("KERNEL_OK")
</pallas_src>

<mosaic_0001>
module attributes {stable_mosaic.version = 11 : i64} {
  func.func @_conv_tile_kernel(%arg0: i32, %arg1: i32, %arg2: memref<1x2x512xf32, #tpu.memory_space<vmem>>, %arg3: memref<1x2x128xf32, #tpu.memory_space<vmem>>, %arg4: memref<8x4xf32, #tpu.memory_space<vmem>>, %arg5: memref<8x1xf32, #tpu.memory_space<vmem>>, %arg6: memref<1x8x512xf32, #tpu.memory_space<vmem>>, %arg7: memref<2x640xf32, #tpu.memory_space<vmem>>) attributes {dimension_semantics = [#tpu.dimension_semantics<parallel>, #tpu.dimension_semantics<parallel>], iteration_bounds = array<i64: 1, 4>, scalar_prefetch = 0 : i64, scratch_operands = 1 : i64, tpu.core_type = #tpu.core_type<tc>, window_params = [{transform_indices = @transform_0, window_bounds = array<i64: 1, 2, 512>}, {transform_indices = @transform_1, window_bounds = array<i64: 1, 2, 128>}, {pipeline_mode = #tpu.pipeline_mode<synchronous>, transform_indices = @transform_2, window_bounds = array<i64: 8, 4>}, {pipeline_mode = #tpu.pipeline_mode<synchronous>, transform_indices = @transform_3, window_bounds = array<i64: 8, 1>}, {transform_indices = @transform_4, window_bounds = array<i64: 1, 8, 512>}]} {
    %c0 = arith.constant 0 : index
    %c0_0 = arith.constant 0 : index
    %c0_1 = arith.constant 0 : index
    %0 = vector.load %arg2[%c0, %c0_0, %c0_1] : memref<1x2x512xf32, #tpu.memory_space<vmem>>, vector<1x2x512xf32>
    %1 = vector.shape_cast %0 : vector<1x2x512xf32> to vector<2x512xf32>
    %c0_2 = arith.constant 0 : index
    %c0_3 = arith.constant 0 : index
    %2 = vector.load %arg7[%c0_2, %c0_3] : memref<2x640xf32, #tpu.memory_space<vmem>>, vector<2x512xf32>
    tpu.vector_store %arg7[%c0_2, %c0_3], %1 {strides = array<i32>} : memref<2x640xf32, #tpu.memory_space<vmem>>, vector<2x512xf32>,
    %c0_4 = arith.constant 0 : index
    %c0_5 = arith.constant 0 : index
    %c0_6 = arith.constant 0 : index
    %3 = vector.load %arg3[%c0_4, %c0_5, %c0_6] : memref<1x2x128xf32, #tpu.memory_space<vmem>>, vector<1x2x128xf32>
    %4 = vector.shape_cast %3 : vector<1x2x128xf32> to vector<2x128xf32>
    %c0_7 = arith.constant 0 : index
    %c512 = arith.constant 512 : index
    %5 = vector.load %arg7[%c0_7, %c512] : memref<2x640xf32, #tpu.memory_space<vmem>>, vector<2x128xf32>
    tpu.vector_store %arg7[%c0_7, %c512], %4 {strides = array<i32>} : memref<2x640xf32, #tpu.memory_space<vmem>>, vector<2x128xf32>,
    %c0_8 = arith.constant 0 : index
    %c0_9 = arith.constant 0 : index
    %6 = vector.load %arg5[%c0_8, %c0_9] : memref<8x1xf32, #tpu.memory_space<vmem>>, vector<8x1xf32>
    %7 = vector.shape_cast %6 : vector<8x1xf32> to vector<8x1xf32>
    %8 = vector.broadcast %7 : vector<8x1xf32> to vector<8x512xf32>
    %c0_10 = arith.constant 0 : index
    %c0_11 = arith.constant 0 : index
    %9 = vector.load %arg7[%c0_10, %c0_11] : memref<2x640xf32, #tpu.memory_space<vmem>>, vector<1x640xf32>
    %10 = vector.shape_cast %9 : vector<1x640xf32> to vector<1x640xf32>
    %11 = vector.broadcast %10 : vector<1x640xf32> to vector<8x640xf32>
    %c0_12 = arith.constant 0 : index
    %c0_13 = arith.constant 0 : index
    %12 = vector.load %arg4[%c0_12, %c0_13] : memref<8x4xf32, #tpu.memory_space<vmem>>, vector<8x1xf32>
    %13 = vector.extract_strided_slice %11 {offsets = [0, 0], sizes = [8, 512], strides = [1, 1]} : vector<8x640xf32> to vector<8x512xf32>
    %14 = vector.broadcast %12 : vector<8x1xf32> to vector<8x512xf32>
    %15 = arith.mulf %14, %13 : vector<8x512xf32>
    %16 = arith.addf %8, %15 : vector<8x512xf32>
    %c0_14 = arith.constant 0 : index
    %c2 = arith.constant 2 : index
    %17 = vector.load %arg4[%c0_14, %c2] : memref<8x4xf32, #tpu.memory_space<vmem>>, vector<8x1xf32>
    %18 = vector.extract_strided_slice %11 {offsets = [0, 1], sizes = [8, 512], strides = [1, 1]} : vector<8x640xf32> to vector<8x512xf32>
    %19 = vector.broadcast %17 : vector<8x1xf32> to vector<8x512xf32>
    %20 = arith.mulf %19, %18 : vector<8x512xf32>
    %21 = arith.addf %16, %20 : vector<8x512xf32>
    %c1 = arith.constant 1 : index
    %c0_15 = arith.constant 0 : index
    %22 = vector.load %arg7[%c1, %c0_15] : memref<2x640xf32, #tpu.memory_space<vmem>>, vector<1x640xf32>
    %23 = vector.shape_cast %22 : vector<1x640xf32> to vector<1x640xf32>
    %24 = vector.broadcast %23 : vector<1x640xf32> to vector<8x640xf32>
    %c0_16 = arith.constant 0 : index
    %c1_17 = arith.constant 1 : index
    %25 = vector.load %arg4[%c0_16, %c1_17] : memref<8x4xf32, #tpu.memory_space<vmem>>, vector<8x1xf32>
    %26 = vector.extract_strided_slice %24 {offsets = [0, 0], sizes = [8, 512], strides = [1, 1]} : vector<8x640xf32> to vector<8x512xf32>
    %27 = vector.broadcast %25 : vector<8x1xf32> to vector<8x512xf32>
    %28 = arith.mulf %27, %26 : vector<8x512xf32>
    %29 = arith.addf %21, %28 : vector<8x512xf32>
    %c0_18 = arith.constant 0 : index
    %c3 = arith.constant 3 : index
    %30 = vector.load %arg4[%c0_18, %c3] : memref<8x4xf32, #tpu.memory_space<vmem>>, vector<8x1xf32>
    %31 = vector.extract_strided_slice %24 {offsets = [0, 1], sizes = [8, 512], strides = [1, 1]} : vector<8x640xf32> to vector<8x512xf32>
    %32 = vector.broadcast %30 : vector<8x1xf32> to vector<8x512xf32>
    %33 = arith.mulf %32, %31 : vector<8x512xf32>
    %34 = arith.addf %29, %33 : vector<8x512xf32>
    %c0_19 = arith.constant 0 : index
    %c0_20 = arith.constant 0 : index
    %c0_21 = arith.constant 0 : index
    %35 = vector.load %arg6[%c0_19, %c0_20, %c0_21] : memref<1x8x512xf32, #tpu.memory_space<vmem>>, vector<1x8x512xf32>
    %36 = vector.shape_cast %35 : vector<1x8x512xf32> to vector<8x512xf32>
    %37 = vector.shape_cast %34 : vector<8x512xf32> to vector<1x8x512xf32>
    tpu.vector_store %arg6[%c0_19, %c0_20, %c0_21], %37 {strides = array<i32>} : memref<1x8x512xf32, #tpu.memory_space<vmem>>, vector<1x8x512xf32>,
    return
  }
  func.func @transform_0(%arg0: i32, %arg1: i32) -> (i32, i32, i32) {
    %c0_i32 = arith.constant 0 : i32
    %c0_i32_0 = arith.constant 0 : i32
    return %arg1, %c0_i32, %arg0 : i32, i32, i32
  }
  func.func @transform_1(%arg0: i32, %arg1: i32) -> (i32, i32, i32) {
    %c1_i32 = arith.constant 1 : i32
    %0 = arith.addi %arg0, %c1_i32 : i32
    %c4_i32 = arith.constant 4 : i32
    %1 = arith.muli %0, %c4_i32 : i32
    %c0_i32 = arith.constant 0 : i32
    %c0_i32_0 = arith.constant 0 : i32
    return %arg1, %c0_i32, %1 : i32, i32, i32
  }
  func.func @transform_2(%arg0: i32, %arg1: i32) -> (i32, i32) {
    %c0_i32 = arith.constant 0 : i32
    %c0_i32_0 = arith.constant 0 : i32
    %c0_i32_1 = arith.constant 0 : i32
    return %c0_i32, %c0_i32_0 : i32, i32
  }
  func.func @transform_3(%arg0: i32, %arg1: i32) -> (i32, i32) {
    %c0_i32 = arith.constant 0 : i32
    %c0_i32_0 = arith.constant 0 : i32
    %c0_i32_1 = arith.constant 0 : i32
    return %c0_i32, %c0_i32_0 : i32, i32
  }
  func.func @transform_4(%arg0: i32, %arg1: i32) -> (i32, i32, i32) {
    %c0_i32 = arith.constant 0 : i32
    %c0_i32_0 = arith.constant 0 : i32
    return %arg1, %c0_i32, %arg0 : i32, i32, i32
  }
}

</mosaic_0001>

<llo_original>
// kernel: tpu_custom_call.1
$region0: #{tpu_custom_call.1}
  #allocation0 [shape = 'u32[]', space=smem, size = 0x4, offset = 0x4, fixed_abs, tag = 'smem constant byte address 0x4 - core index']
  #allocation1 [shape = 'u32[144,128]{1,0:T(1,128)}', space=vmem, size = 0x12000, scoped, tag = 'internal scratch']
  #allocation2 [shape = 'f32[2,640]{1,0:T(2,128)}', space=vmem, size = 0x1400, scoped, tag = 'scratch operand']
  %s0 = inlined_call_operand.hbm [shape: f32[4,2,640], index: 0, kind: input, shape index: {}]
  %s1 = inlined_call_operand.hbm [shape: f32[4,2,640], index: 1, kind: input, shape index: {}]
  %s2 = inlined_call_operand.vmem [shape: f32[8,4], index: 2, kind: input, shape index: {}]
  %s3 = inlined_call_operand.vmem [shape: f32[8,1], index: 3, kind: input, shape index: {}]
  %s4 = inlined_call_operand.hbm [shape: f32[4,8,9], index: 4, kind: output, shape index: {}]
  %s5 = sld [smem:[#allocation0]]
  $region57: #{tpu_custom_call.1} parent=0
    _
  %s7 = ssub.s32 1, %s5
  %s8 = scalar_select 0, %s7, %s5
  $region1: #{tpu_custom_call.1} parent=0
    #allocation3 [shape = 'u8[8192]{0}', space=vmem, size = 0x2000, scoped, tag = 'input window, operand 0']
    #allocation4 [shape = 's32[2]{0}', space=sflag, size = 0x8, scoped, tag = 'scoped memory for tpu_custom_call.1']
    #allocation5 [shape = 's32[2]{0}', space=sflag, size = 0x8, scoped, tag = 'scoped memory for tpu_custom_call.1']
    #allocation6 [shape = 'u8[2048]{0}', space=vmem, size = 0x800, scoped, tag = 'input window, operand 1']
    #allocation7 [shape = 's32[2]{0}', space=sflag, size = 0x8, scoped, tag = 'scoped memory for tpu_custom_call.1']
    #allocation8 [shape = 'u8[32768]{0}', space=vmem, size = 0x8000, scoped, tag = 'output window, operand 0']
    %9 = vsyncpa [#allocation4], 0
    %s10 = scalar_lea.sflag [#allocation4], 1
    %11 = vsyncpa %s10, 0
    %12 = vsyncpa [#allocation7], 0
    %s13 = scalar_lea.sflag [#allocation7], 1
    %14 = vsyncpa %s13, 0
    %15 = vsyncpa [#allocation5], 0
    %s16 = scalar_lea.sflag [#allocation5], 1
    %17 = vsyncpa %s16, 0
    loop: start=0, step=1, limit=6
    $region2: #{tpu_custom_call.1} parent=1 // loop_pre_header
      _
    $region3: #{tpu_custom_call.1} parent=1 // loop_header
      %s19 = sphi 0, %s23
      %p20 = scmp.ge.s32.totalorder %s19, 6
      %s26 = sphi 0, %s38
      %s27 = sphi 0, %s34
      %s28 = sphi 0, %s26
      %s29 = sphi 0, %s27
      %s30 = sphi 0, %s28
      %s31 = sphi 0, %s29
      %s43 = sphi 0, %s45
      %s46 = sphi 0, %s43
      %s47 = sphi 0, %s46
      %s63 = sphi 0, %s47
      %s75 = sphi 0, %s77
      %s78 = sphi 0, %s75
      %s79 = sphi 0, %s78
      %s95 = sphi 0, %s79
      %s99 = sphi 0, %s99
      %s101 = sphi 0, %s99
      %s102 = sphi 0, %s101
      %s116 = sphi 0, %s102
      %s120 = sphi 0, %s120
      %s122 = sphi 0, %s120
      %s123 = sphi 0, %s122
      %s137 = sphi 0, %s123
      %s145 = sphi 0, %s147
      %s148 = sphi 0, %s145
      %s149 = sphi 0, %s148
      %s165 = sphi 0, %s149
    $region4: #{tpu_custom_call.1} parent=1 // loop_header_branch
      %22 = sbr.rel (%p20) target = $region8
    $region5: #{tpu_custom_call.1} parent=1 // loop_body
      %s24 = ssub.s32 %s19, 1
      %s25 = ssub.s32 %s19, 2
      %s32 = sadd.s32 1, %s27
      %p33 = scmp.ge.s32.totalorder %s32, 4
      %s34 = scalar_select %p33, 0, %s32
      %s35 = sadd.s32 1, %s26
      %s36 = scalar_select %p33, %s35, %s26
      %p37 = scmp.ge.s32.totalorder %s36, 1
      %s38 = scalar_select %p37, 0, %s36
      %s39 = ssub.s32 %s27, %s34
      %s40 = ssub.s32 %s26, %s38
      %s41 = sor.u32 %s39, %s40
      %p42 = scmp.eq.s32.totalorder %s41, 0
      %s44 = sadd.s32 %s43, 1
      %s45 = scalar_select %p42, %s43, %s44
      %p48 = pneg %p42
      %p49 = scmp.eq.s32.totalorder %s19, 3
      %p50 = por %p48, %p49
      %p51 = scmp.ne.s32.totalorder %s43, %s46
      %p52 = scmp.eq.s32.totalorder %s19, 0
      %p53 = por %p51, %p52
      %p54 = scmp.ne.s32.totalorder %s43, %s46
      %p55 = scmp.eq.s32.totalorder %s24, 3
      %p56 = por %p54, %p55
      %p57 = scmp.ne.s32.totalorder %s46, %s47
      %p58 = scmp.eq.s32.totalorder %s24, 0
      %p59 = por %p57, %p58
      %p60 = scmp.ne.s32.totalorder %s46, %s47
      %p61 = scmp.eq.s32.totalorder %s25, 3
      %p62 = por %p60, %p61
      %p64 = scmp.ne.s32.totalorder %s47, %s63
      %p65 = scmp.eq.s32.totalorder %s25, 0
      %p66 = por %p64, %p65
      %s67 = sadd.s32 %s26, 1
      %s68 = smul.u32 %s67, 4
      %s69 = sadd.s32 %s38, 1
      %s70 = smul.u32 %s69, 4
      %s71 = ssub.s32 %s27, %s34
      %s72 = ssub.s32 %s68, %s70
      %s73 = sor.u32 %s71, %s72
      %p74 = scmp.eq.s32.totalorder %s73, 0
      %s76 = sadd.s32 %s75, 1
      %s77 = scalar_select %p74, %s75, %s76
      %p80 = pneg %p74
      %p81 = scmp.eq.s32.totalorder %s19, 3
      %p82 = por %p80, %p81
      %p83 = scmp.ne.s32.totalorder %s75, %s78
      %p84 = scmp.eq.s32.totalorder %s19, 0
      %p85 = por %p83, %p84
      %p86 = scmp.ne.s32.totalorder %s75, %s78
      %p87 = scmp.eq.s32.totalorder %s24, 3
      %p88 = por %p86, %p87
      %p89 = scmp.ne.s32.totalorder %s78, %s79
      %p90 = scmp.eq.s32.totalorder %s24, 0
      %p91 = por %p89, %p90
      %p92 = scmp.ne.s32.totalorder %s78, %s79
      %p93 = scmp.eq.s32.totalorder %s25, 3
      %p94 = por %p92, %p93
      %p96 = scmp.ne.s32.totalorder %s79, %s95
      %p97 = scmp.eq.s32.totalorder %s25, 0
      %p98 = por %p96, %p97
      %s100 = sadd.s32 %s99, 1
      %p103 = scmp.eq.s32.totalorder %s19, 3
      %p104 = scmp.ne.s32.totalorder %s99, %s101
      %p105 = scmp.eq.s32.totalorder %s19, 0
      %p106 = por %p104, %p105
      %p107 = scmp.ne.s32.totalorder %s99, %s101
      %p108 = scmp.eq.s32.totalorder %s24, 3
      %p109 = por %p107, %p108
      %p110 = scmp.ne.s32.totalorder %s101, %s102
      %p111 = scmp.eq.s32.totalorder %s24, 0
      %p112 = por %p110, %p111
      %p113 = scmp.ne.s32.totalorder %s101, %s102
      %p114 = scmp.eq.s32.totalorder %s25, 3
      %p115 = por %p113, %p114
      %p117 = scmp.ne.s32.totalorder %s102, %s116
      %p118 = scmp.eq.s32.totalorder %s25, 0
      %p119 = por %p117, %p118
      %s121 = sadd.s32 %s120, 1
      %p124 = scmp.eq.s32.totalorder %s19, 3
      %p125 = scmp.ne.s32.totalorder %s120, %s122
      %p126 = scmp.eq.s32.totalorder %s19, 0
      %p127 = por %p125, %p126
      %p128 = scmp.ne.s32.totalorder %s120, %s122
      %p129 = scmp.eq.s32.totalorder %s24, 3
      %p130 = por %p128, %p129
      %p131 = scmp.ne.s32.totalorder %s122, %s123
      %p132 = scmp.eq.s32.totalorder %s24, 0
      %p133 = por %p131, %p132
      %p134 = scmp.ne.s32.totalorder %s122, %s123
      %p135 = scmp.eq.s32.totalorder %s25, 3
      %p136 = por %p134, %p135
      %p138 = scmp.ne.s32.totalorder %s123, %s137
      %p139 = scmp.eq.s32.totalorder %s25, 0
      %p140 = por %p138, %p139
      %s141 = ssub.s32 %s27, %s34
      %s142 = ssub.s32 %s26, %s38
      %s143 = sor.u32 %s141, %s142
      %p144 = scmp.eq.s32.totalorder %s143, 0
      %s146 = sadd.s32 %s145, 1
      %s147 = scalar_select %p144, %s145, %s146
      %p150 = pneg %p144
      %p151 = scmp.eq.s32.totalorder %s19, 3
      %p152 = por %p150, %p151
      %p153 = scmp.ne.s32.totalorder %s145, %s148
      %p154 = scmp.eq.s32.totalorder %s19, 0
      %p155 = por %p153, %p154
      %p156 = scmp.ne.s32.totalorder %s145, %s148
      %p157 = scmp.eq.s32.totalorder %s24, 3
      %p158 = por %p156, %p157
      %p159 = scmp.ne.s32.totalorder %s148, %s149
      %p160 = scmp.eq.s32.totalorder %s24, 0
      %p161 = por %p159, %p160
      %p162 = scmp.ne.s32.totalorder %s148, %s149
      %p163 = scmp.eq.s32.totalorder %s25, 3
      %p164 = por %p162, %p163
      %p166 = scmp.ne.s32.totalorder %s149, %s165
      %p167 = scmp.eq.s32.totalorder %s25, 0
      %p168 = por %p166, %p167
      %p169 = scmp.le.s32.totalorder 1, %s19
      %p170 = scmp.lt.s32.totalorder %s19, 5
      %p171 = pnand %p169, %p170
      %p172 = pneg %p171
      // Predicated region
      $region9: #{tpu_custom_call.1} parent=5 // pred_check
        _
      $region10: #{tpu_custom_call.1} parent=5 // pred_check_branch
        %174 = sbr.rel (%p171) target = $region12
      $region11: #{tpu_custom_call.1} parent=5 // pred_region
        %s175 = ssub.s32 %s19, 1
        // Predicated region
        $region13: #{tpu_custom_call.1} parent=11 // pred_check
          %p176 = pneg %p112
        $region14: #{tpu_custom_call.1} parent=11 // pred_check_branch
          %178 = sbr.rel (%p176) target = $region16
        $region15: #{tpu_custom_call.1} parent=11 // pred_region
          _
        $region16: #{tpu_custom_call.1} parent=11 // pred_fallthru
          _
        // Predicated region
        $region17: #{tpu_custom_call.1} parent=11 // pred_check
          %p179 = pneg %p133
        $region18: #{tpu_custom_call.1} parent=11 // pred_check_branch
          %181 = sbr.rel (%p179) target = $region20
        $region19: #{tpu_custom_call.1} parent=11 // pred_region
          _
        $region20: #{tpu_custom_call.1} parent=11 // pred_fallthru
          _
      $region12: #{tpu_custom_call.1} parent=5 // pred_fallthru
        _
      %p182 = scmp.lt.s32.totalorder %s19, 4
      // Predicated region
      $region21: #{tpu_custom_call.1} parent=5 // pred_check
        %p183 = pneg %p182
      $region22: #{tpu_custom_call.1} parent=5 // pred_check_branch
        %185 = sbr.rel (%p183) target = $region24
      $region23: #{tpu_custom_call.1} parent=5 // pred_region
        // Predicated region
        $region25: #{tpu_custom_call.1} parent=23 // pred_check
          %p186 = pneg %p53
        $region26: #{tpu_custom_call.1} parent=23 // pred_check_branch
          %188 = sbr.rel (%p186) target = $region28
        $region27: #{tpu_custom_call.1} parent=23 // pred_region
          %s189 = sand.u32 %s43, 1
          %s190 = scalar_lea.sflag [#allocation4], %s189
          %s191 = sand.u32 %s43, 1
          %s192 = smul.addr %s191, 8
          %s193 = scalar_lea.vmem [#allocation3], %s192
          %s194 = smul.u32 4, %s26
          %s195 = ssub.s32 5, %s194
          %p196 = scmp.lt.s32.totalorder %s195, 4
          %s197 = scalar_select %p196, %s195, 4
          %s198 = smul.u32 32, %s197
          %s200 = ssub.s32 128, %s198
          %201 = vsyncadd %s190, %s200
          %p202 = scmp.ne.s32.totalorder 0, %s198
          %s203 = smul.addr %s27, 5
          %s204 = sadd.s32 %s194, %s203
          %s205 = smul.addr %s204, 32
          %s206 = scalar_lea.hbm %s0, %s205
          %s207 = smul.u32 %s197, 2
          %s208 = sshll.u32 %s207, 4
          %s209 = sshll.u32 %s193, 4
          %s210 = int_to_ptr.vmem [resolvable:$true] %s209
          %212 = dma.hbm_to_vmem [thread:$0]  (%p202), %s206, %s208, %s210, %s190
        $region28: #{tpu_custom_call.1} parent=23 // pred_fallthru
          _
        // Predicated region
        $region29: #{tpu_custom_call.1} parent=23 // pred_check
          %p213 = pneg %p85
        $region30: #{tpu_custom_call.1} parent=23 // pred_check_branch
          %215 = sbr.rel (%p213) target = $region32
        $region31: #{tpu_custom_call.1} parent=23 // pred_region
          %s216 = sand.u32 %s75, 1
          %s217 = scalar_lea.sflag [#allocation7], %s216
          %s218 = sand.u32 %s75, 1
          %s219 = smul.addr %s218, 2
          %s220 = scalar_lea.vmem [#allocation6], %s219
          %s221 = sadd.s32 %s26, 1
          %s222 = smul.u32 %s221, 4
          %s224 = ssub.s32 32, 32
          %225 = vsyncadd %s217, %s224
          %s226 = smul.addr %s27, 5
          %s227 = sadd.s32 %s222, %s226
          %s228 = smul.addr %s227, 32
          %s229 = scalar_lea.hbm %s1, %s228
          %s231 = sshll.u32 %s220, 4
          %s232 = int_to_ptr.vmem [resolvable:$true] %s231
          %234 = dma.hbm_to_vmem [thread:$0]  %s229, 32, %s232, %s217
        $region32: #{tpu_custom_call.1} parent=23 // pred_fallthru
          _
      $region24: #{tpu_custom_call.1} parent=5 // pred_fallthru
        _
      %p235 = scmp.le.s32.totalorder 1, %s19
      %p236 = scmp.lt.s32.totalorder %s19, 5
      %p237 = pnand %p235, %p236
      %p238 = pneg %p237
      // Predicated region
      $region33: #{tpu_custom_call.1} parent=5 // pred_check
        _
      $region34: #{tpu_custom_call.1} parent=5 // pred_check_branch
        %240 = sbr.rel (%p237) target = $region36
      $region35: #{tpu_custom_call.1} parent=5 // pred_region
        %s241 = ssub.s32 %s19, 1
        %s242 = sand.u32 %s46, 1
        %s243 = scalar_lea.sflag [#allocation4], %s242
        %s244 = sand.u32 %s46, 1
        %s245 = smul.addr %s244, 8
        %s246 = scalar_lea.vmem [#allocation3], %s245
        // Predicated region
        $region37: #{tpu_custom_call.1} parent=35 // pred_check
          %p247 = pneg %p59
        $region38: #{tpu_custom_call.1} parent=35 // pred_check_branch
          %249 = sbr.rel (%p247) target = $region40
        $region39: #{tpu_custom_call.1} parent=35 // pred_region
          %250 = dma.done %s243, 128
        $region40: #{tpu_custom_call.1} parent=35 // pred_fallthru
          _
        %s251 = sand.u32 %s78, 1
        %s252 = scalar_lea.sflag [#allocation7], %s251
        %s253 = sand.u32 %s78, 1
        %s254 = smul.addr %s253, 2
        %s255 = scalar_lea.vmem [#allocation6], %s254
        // Predicated region
        $region41: #{tpu_custom_call.1} parent=35 // pred_check
          %p256 = pneg %p91
        $region42: #{tpu_custom_call.1} parent=35 // pred_check_branch
          %258 = sbr.rel (%p256) target = $region44
        $region43: #{tpu_custom_call.1} parent=35 // pred_region
          %259 = dma.done %s252, 32
        $region44: #{tpu_custom_call.1} parent=35 // pred_fallthru
          _
        %s260 = sand.u32 %s46, 1
        %s261 = scalar_lea.sflag [#allocation4], %s260
        %s262 = sand.u32 %s46, 1
        %s263 = smul.addr %s262, 8
        %s264 = scalar_lea.vmem [#allocation3], %s263
        %p265 = pneg %p59
        %p266 = pneg %p56
        %s267 = sand.u32 %s78, 1
        %s268 = scalar_lea.sflag [#allocation7], %s267
        %s269 = sand.u32 %s78, 1
        %s270 = smul.addr %s269, 2
        %s271 = scalar_lea.vmem [#allocation6], %s270
        %p272 = pneg %p91
        %p273 = pneg %p88
        %p274 = pneg %p112
        %p275 = pneg %p109
        %p276 = pneg %p133
        %p277 = pneg %p130
        %p278 = pneg %p161
        %p279 = pneg %p158
        %s280 = sand.u32 %s148, 1
        %s281 = scalar_lea.sflag [#allocation5], %s280
        %s282 = sand.u32 %s148, 1
        %s283 = smul.addr %s282, 32
        %s284 = scalar_lea.vmem [#allocation8], %s283
        %s285 = smul.u32 4, %s28
        %s286 = ssub.s32 5, %s285
        %p287 = scmp.lt.s32.totalorder %s286, 4
        %s288 = scalar_select %p287, %s286, 4
        %s289 = smul.u32 32, %s288
        %s290 = sadd.s32 %s28, 1
        %s291 = smul.u32 %s290, 4
        %s292 = smul.u32 4, %s28
        %s293 = ssub.s32 1, %s292
        %s294 = smul.u32 128, %s293
        %v295 = vld [vmem:[%s246] sm:$0xff]
        %296 = vst [vmem:[#allocation2] sm:$0xff] %v295
        %v297 = vld [vmem:[%s255] sm:$0x3]
        %298 = vst [vmem:[#allocation2 + $0x8] sm:$0x3] %v297
        %v299 = vld [vmem:[%s3] sm:$0xff]
        %301 = vset.pattern.permute.xlu0 0
        %302 = vperm.xlu0 %301, %v299
        %v303 = vpop.permute.xlu0 %302
        %v305 = vld [vmem:[#allocation2] ss:$2 sm:$0x1f]
        %v306 = vld [vmem:[%s2] sm:$0xff]
        %v308 = vlaneseq
        %v309 = vshrl.u32 %v308, 7
        %v310 = vsub.s32 0, %v309
        %v311 = vrot.slane %v305, %v310
        %v312 = vlaneseq
        %v313 = vshrl.u32 %v312, 7
        %v314 = vsub.s32 1, %v313
        %v315 = vrot.slane %v305, %v314
        %v316 = vlaneseq
        %v317 = vshrl.u32 %v316, 7
        %v318 = vsub.s32 2, %v317
        %v319 = vrot.slane %v305, %v318
        %v320 = vlaneseq
        %v321 = vshrl.u32 %v320, 7
        %v322 = vsub.s32 3, %v321
        %v323 = vrot.slane %v305, %v322
        %329 = vset.pattern.permute.xlu0 0
        %330 = vperm.xlu0 %329, %v306
        %v331 = vpop.permute.xlu0 %330
        %v333 = vmul.f32 %v331, %v311
        %v334 = vmul.f32 %v331, %v315
        %v335 = vmul.f32 %v331, %v319
        %v336 = vmul.f32 %v331, %v323
        %v337 = vadd.f32 %v303, %v333
        %v338 = vadd.f32 %v303, %v334
        %v339 = vadd.f32 %v303, %v335
        %v340 = vadd.f32 %v303, %v336
        %v341 = vlaneseq
        %v342 = vshrl.u32 %v341, 7
        %v343 = vsub.s32 4, %v342
        %v344 = vrot.slane %v305, %v343
        %346 = vset.pattern.permute.xlu0 2
        %347 = vperm.xlu0 %346, %v306
        %v348 = vpop.permute.xlu0 %347
        %v350 = vmul.f32 %v348, %v311
        %v351 = vmul.f32 %v348, %v315
        %v352 = vmul.f32 %v348, %v319
        %v353 = vmul.f32 %v348, %v323
        %v354 = vmul.f32 %v348, %v344
        %360 = vrot.lane.b32.xlu0 %v350, 127
        %v361 = vpop.permute.xlu0 %360
        %362 = vrot.lane.b32.xlu0 %v351, 127
        %v363 = vpop.permute.xlu0 %362
        %364 = vrot.lane.b32.xlu0 %v352, 127
        %v365 = vpop.permute.xlu0 %364
        %366 = vrot.lane.b32.xlu0 %v353, 127
        %v367 = vpop.permute.xlu0 %366
        %368 = vrot.lane.b32.xlu0 %v354, 127
        %v369 = vpop.permute.xlu0 %368
        %vm370 = vcmask 1039360
        %v371 = vsel %vm370, %v361, %v363
        %v372 = vsel %vm370, %v363, %v365
        %v373 = vsel %vm370, %v365, %v367
        %v374 = vsel %vm370, %v367, %v369
        %v379 = vadd.f32 %v337, %v371
        %v380 = vadd.f32 %v338, %v372
        %v381 = vadd.f32 %v339, %v373
        %v382 = vadd.f32 %v340, %v374
        %s383 = scalar_lea.vmem [#allocation2], 1
        %v384 = vld [vmem:[%s383] ss:$2 sm:$0x1f]
        %v386 = vlaneseq
        %v387 = vshrl.u32 %v386, 7
        %v388 = vsub.s32 0, %v387
        %v389 = vrot.slane %v384, %v388
        %v390 = vlaneseq
        %v391 = vshrl.u32 %v390, 7
        %v392 = vsub.s32 1, %v391
        %v393 = vrot.slane %v384, %v392
        %v394 = vlaneseq
        %v395 = vshrl.u32 %v394, 7
        %v396 = vsub.s32 2, %v395
        %v397 = vrot.slane %v384, %v396
        %v398 = vlaneseq
        %v399 = vshrl.u32 %v398, 7
        %v400 = vsub.s32 3, %v399
        %v401 = vrot.slane %v384, %v400
        %406 = vset.pattern.permute.xlu0 1
        %407 = vperm.xlu0 %406, %v306
        %v408 = vpop.permute.xlu0 %407
        %v410 = vmul.f32 %v408, %v389
        %v411 = vmul.f32 %v408, %v393
        %v412 = vmul.f32 %v408, %v397
        %v413 = vmul.f32 %v408, %v401
        %v414 = vadd.f32 %v379, %v410
        %v415 = vadd.f32 %v380, %v411
        %v416 = vadd.f32 %v381, %v412
        %v417 = vadd.f32 %v382, %v413
        %v418 = vlaneseq
        %v419 = vshrl.u32 %v418, 7
        %v420 = vsub.s32 4, %v419
        %v421 = vrot.slane %v384, %v420
        %423 = vset.pattern.permute.xlu0 3
        %424 = vperm.xlu0 %423, %v306
        %v425 = vpop.permute.xlu0 %424
        %v427 = vmul.f32 %v425, %v389
        %v428 = vmul.f32 %v425, %v393
        %v429 = vmul.f32 %v425, %v397
        %v430 = vmul.f32 %v425, %v401
        %v431 = vmul.f32 %v425, %v421
        %437 = vrot.lane.b32.xlu0 %v427, 127
        %v438 = vpop.permute.xlu0 %437
        %439 = vrot.lane.b32.xlu0 %v428, 127
        %v440 = vpop.permute.xlu0 %439
        %441 = vrot.lane.b32.xlu0 %v429, 127
        %v442 = vpop.permute.xlu0 %441
        %443 = vrot.lane.b32.xlu0 %v430, 127
        %v444 = vpop.permute.xlu0 %443
        %445 = vrot.lane.b32.xlu0 %v431, 127
        %v446 = vpop.permute.xlu0 %445
        %v447 = vsel %vm370, %v438, %v440
        %v448 = vsel %vm370, %v440, %v442
        %v449 = vsel %vm370, %v442, %v444
        %v450 = vsel %vm370, %v444, %v446
        %v455 = vadd.f32 %v414, %v447
        %v456 = vadd.f32 %v415, %v448
        %v457 = vadd.f32 %v416, %v449
        %v458 = vadd.f32 %v417, %v450
        %459 = vst [vmem:[%s284] sm:$0xff] %v455
        %460 = vst [vmem:[%s284 + $0x8] sm:$0xff] %v456
        %461 = vst [vmem:[%s284 + $0x10] sm:$0xff] %v457
        %462 = vst [vmem:[%s284 + $0x18] sm:$0xff] %v458
        %s463 = sand.u32 %s148, 1
        %s464 = scalar_lea.sflag [#allocation5], %s463
        %s465 = sand.u32 %s148, 1
        %s466 = smul.addr %s465, 32
        %s467 = scalar_lea.vmem [#allocation8], %s466
        // Predicated region
        $region45: #{tpu_custom_call.1} parent=35 // pred_check
          %p468 = pneg %p158
        $region46: #{tpu_custom_call.1} parent=35 // pred_check_branch
          %470 = sbr.rel (%p468) target = $region48
        $region47: #{tpu_custom_call.1} parent=35 // pred_region
          %s471 = smul.u32 4, %s28
          %s472 = ssub.s32 1, %s471
          %s473 = smul.u32 128, %s472
          %s475 = ssub.s32 512, %s473
          %476 = vsyncadd %s464, %s475
          %p477 = scmp.ne.s32.totalorder 0, %s473
          %s478 = sadd.s32 %s471, %s29
          %s479 = smul.addr %s478, 128
          %s480 = scalar_lea.hbm %s4, %s479
          %s481 = smul.u32 %s472, 8
          %s482 = sshll.u32 %s481, 4
          %s483 = sshll.u32 %s467, 4
          %s484 = int_to_ptr.vmem [resolvable:$true] %s483
          %486 = dma.vmem_to_hbm [thread:$0]  (%p477), %s484, %s482, %s480, %s464
        $region48: #{tpu_custom_call.1} parent=35 // pred_fallthru
          _
      $region36: #{tpu_custom_call.1} parent=5 // pred_fallthru
        _
      %p487 = scmp.le.s32.totalorder 2, %s19
      // Predicated region
      $region49: #{tpu_custom_call.1} parent=5 // pred_check
        %p488 = pneg %p487
      $region50: #{tpu_custom_call.1} parent=5 // pred_check_branch
        %490 = sbr.rel (%p488) target = $region52
      $region51: #{tpu_custom_call.1} parent=5 // pred_region
        %s491 = ssub.s32 %s19, 2
        // Predicated region
        $region53: #{tpu_custom_call.1} parent=51 // pred_check
          %p492 = pneg %p164
        $region54: #{tpu_custom_call.1} parent=51 // pred_check_branch
          %494 = sbr.rel (%p492) target = $region56
        $region55: #{tpu_custom_call.1} parent=51 // pred_region
          %s495 = sand.u32 %s149, 1
          %s496 = scalar_lea.sflag [#allocation5], %s495
          %s497 = sand.u32 %s149, 1
          %s498 = smul.addr %s497, 32
          %s499 = scalar_lea.vmem [#allocation8], %s498
          %500 = dma.done %s496, 512
        $region56: #{tpu_custom_call.1} parent=51 // pred_fallthru
          _
      $region52: #{tpu_custom_call.1} parent=5 // pred_fallthru
        _
    $region6: #{tpu_custom_call.1} parent=1 // loop_footer
      %s23 = sadd.s32 1, %s19
    $region7: #{tpu_custom_call.1} parent=1 // loop_footer_branch
      %18 = sbr.rel target = $region3
    $region8: #{tpu_custom_call.1} parent=1 // loop_exit
      _
    %501 = vsyncpa [#allocation4], 1
    %s502 = scalar_lea.sflag [#allocation4], 1
    %503 = vsyncpa %s502, 1
    %504 = vsyncpa [#allocation7], 1
    %s505 = scalar_lea.sflag [#allocation7], 1
    %506 = vsyncpa %s505, 1
    %507 = vsyncpa [#allocation5], 1
    %s508 = scalar_lea.sflag [#allocation5], 1
    %509 = vsyncpa %s508, 1

</llo_original>
